<compile_context>
chip_gen: v5e
topology: v5e:2x2
jax: 0.10.0
libtpu: 0.0.40
codegen_flags: <defaults>
</compile_context>

<pallas_src>
import math

import jax
import jax.numpy as jnp
from jax.experimental import pallas as pl
from jax.experimental.pallas import tpu as pltpu


# ----------------------------- embedding setup (glue) -----------------------------

def pixel_freq_bands(num_bands, max_freq=224.0, linear_bands=True, dtype=jnp.float32):
    if linear_bands:
        bands = jnp.linspace(1.0, max_freq / 2.0, num_bands, dtype=dtype)
    else:
        bands = 2.0 ** jnp.linspace(0.0, math.log(max_freq, 2) - 1.0, num_bands, dtype=dtype)
    return bands * math.pi


def build_rotary_pos_embed(feat_shape, bands, dtype=jnp.float32):
    # in_pixels=True path of build_fourier_pos_embed (concat_out=False)
    axes = [jnp.linspace(-1.0, 1.0, int(s), dtype=dtype) for s in feat_shape]
    grid = jnp.stack(jnp.meshgrid(*axes, indexing="ij"), axis=-1)   # (*feat, k)
    grid = grid[..., None]                                          # (*feat, k, 1)
    pos = grid * bands                                              # (*feat, k, nb)
    pos_sin, pos_cos = jnp.sin(pos), jnp.cos(pos)
    N = int(math.prod(int(s) for s in feat_shape))
    # reshape(N, -1).repeat_interleave(2, -1)
    sin_emb = jnp.repeat(pos_sin.reshape(N, -1), 2, axis=-1)
    cos_emb = jnp.repeat(pos_cos.reshape(N, -1), 2, axis=-1)
    return sin_emb, cos_emb


def fold_rope_tables(sin_emb, cos_emb, dtype):
    """Fold rot()'s even/odd sign-swap into the sin table (built once, cached)."""
    D = sin_emb.shape[-1]
    even = (jnp.arange(D) % 2) == 0
    sin_neg_even = jnp.where(even, -sin_emb, 0.0)   # pairs with roll(x, -1)
    sin_pos_odd = jnp.where(even, 0.0, sin_emb)     # pairs with roll(x, +1)
    return (cos_emb.astype(dtype),
            sin_neg_even.astype(dtype),
            sin_pos_odd.astype(dtype))


# --------------------------------- Pallas kernel ----------------------------------

def _rope_kernel(x_ref, cos_ref, sin_ne_ref, sin_po_ref, o_ref):
    x = x_ref[...]                                   # (tr, W)
    W = x.shape[-1]
    # pltpu.roll == jnp.roll semantics; shifts kept non-negative.
    left = pltpu.roll(x, shift=W - 1, axis=1)        # left[i]  = x[(i+1) % W]
    right = pltpu.roll(x, shift=1, axis=1)           # right[i] = x[(i-1) % W]
    # Wrap-around elements of the rolls are multiplied by zeros in the folded
    # sin tables, so circular wrap is harmless (also across flattened rows).
    o_ref[...] = x * cos_ref[...] + left * sin_ne_ref[...] + right * sin_po_ref[...]


def _pick_lane_width(total):
    # Largest multiple-of-128 lane width (<= 512) that evenly divides the
    # flattened (N*D) extent. Every candidate is even, so (even, odd) rotary
    # pairs are never split across a row.
    for w in (512, 384, 256, 128):
        if total % w == 0:
            return w
    return None


def _pick_row_tile(rows, lane, itemsize, target_bytes=1 << 20):
    # Aim for ~1 MiB blocks (HBM-roofline sweet spot); tr must be a multiple
    # of 8 (sublane tiling) unless it equals the full row extent.
    target = max(8, target_bytes // max(1, lane * itemsize))
    if rows <= target:
        return rows
    t = (min(rows, target) // 8) * 8
    while t >= 8:
        if rows % t == 0:
            return t
        t -= 8
    return rows  # fall back: full-extent block is always legal


def apply_rot_embed_pallas(x, cos_emb, sin_neg_even, sin_pos_odd):
    B, C, L = x.shape
    N, D = cos_emb.shape
    assert L == D and C in (1, N), \
        "shapes must be broadcast-compatible like the torch forward"
    if C == 1 and N != 1:
        # torch broadcasting: output is (B, N, D) even though x is (B, 1, D)
        x = jnp.broadcast_to(x, (B, N, D))

    # Present a lane-dense layout to the kernel: flatten (N, D) -> (R, W) with
    # W a multiple of 128 (unmasked vector stores). Tables flatten identically,
    # so lane parity / pair adjacency are preserved (D and W both even).
    total = N * D
    W = _pick_lane_width(total)
    if W is None:
        R, W = N, D   # fallback: full-extent block (masked stores, still correct)
    else:
        R = total // W
        x = x.reshape(B, R, W)
        cos_emb = cos_emb.reshape(R, W)
        sin_neg_even = sin_neg_even.reshape(R, W)
        sin_pos_odd = sin_pos_odd.reshape(R, W)

    itemsize = jnp.dtype(x.dtype).itemsize
    tr = _pick_row_tile(R, W, itemsize)
    grid = (R // tr, B)   # rows outer (tables stay resident across the batch loop)

    out = pl.pallas_call(
        _rope_kernel,
        out_shape=jax.ShapeDtypeStruct((B, R, W), x.dtype),
        grid=grid,
        in_specs=[
            pl.BlockSpec((None, tr, W), lambda r, b: (b, r, 0)),   # x (batch squeezed)
            pl.BlockSpec((tr, W), lambda r, b: (r, 0)),            # cos
            pl.BlockSpec((tr, W), lambda r, b: (r, 0)),            # -sin on even lanes
            pl.BlockSpec((tr, W), lambda r, b: (r, 0)),            # +sin on odd lanes
        ],
        out_specs=pl.BlockSpec((None, tr, W), lambda r, b: (b, r, 0)),
        compiler_params=pltpu.CompilerParams(
            dimension_semantics=("parallel", "parallel")),
    )(x, cos_emb, sin_neg_even, sin_pos_odd)

    return out.reshape(B, N, D)


# ----------------------------------- module ---------------------------------------

class RotaryEmbed:
    def __init__(self, dim, max_res=224, linear_bands=False):
        self.dim = dim
        # deterministic buffer, exactly as in the torch __init__
        self.bands = pixel_freq_bands(dim // 4, float(max_res), linear_bands=linear_bands)
        self._table_cache = {}

    def get_embed(self, shape):
        return build_rotary_pos_embed(shape, self.bands)

    def _get_folded_tables(self, shape, dtype):
        key = (tuple(int(s) for s in shape), jnp.dtype(dtype).name)
        if key not in self._table_cache:
            sin_emb, cos_emb = self.get_embed(shape)
            self._table_cache[key] = fold_rope_tables(sin_emb, cos_emb, dtype)
        return self._table_cache[key]

    def __call__(self, x):
        cos_emb, sin_ne, sin_po = self._get_folded_tables(x.shape[2:], x.dtype)
        return apply_rot_embed_pallas(x, cos_emb, sin_ne, sin_po)


# -------------------------------- reference check ---------------------------------

def _rot_ref(x):
    return jnp.stack([-x[..., 1::2], x[..., ::2]], axis=-1).reshape(x.shape)


if __name__ == "__main__":
    key = jax.random.PRNGKey(0)

    def run_case(dim, B, C):
        L = dim // 2   # required for the torch forward's broadcasting to resolve
        k = jax.random.fold_in(key, dim * 1000 + C)
        x = jax.random.normal(k, (B, C, L), dtype=jnp.float32)

        module = RotaryEmbed(dim=dim, max_res=224, linear_bands=False)
        out = jax.block_until_ready(module(x))

        # pure-JAX reference of the exact torch forward semantics
        sin_emb, cos_emb = module.get_embed(x.shape[2:])
        ref = x * cos_emb + _rot_ref(x) * sin_emb
        assert out.shape == ref.shape, (out.shape, ref.shape)
        assert jnp.allclose(out, ref, atol=1e-5, rtol=1e-5), f"mismatch dim={dim} C={C}"

    run_case(dim=32, B=2, C=16)   # C == L == dim//2; (N*D)=256 -> lane-dense W=256
    run_case(dim=32, B=2, C=1)    # channel-broadcast branch (output (B, N, D))
    run_case(dim=64, B=2, C=32)   # (N*D)=1024 -> flattened to (2, 512) rows

    print("KERNEL_OK")
</pallas_src>

<mosaic_0001>
module attributes {stable_mosaic.version = 11 : i64} {
  func.func @_rope_kernel(%arg0: i32, %arg1: i32, %arg2: memref<1x1x256xf32, #tpu.memory_space<vmem>>, %arg3: memref<1x256xf32, #tpu.memory_space<vmem>>, %arg4: memref<1x256xf32, #tpu.memory_space<vmem>>, %arg5: memref<1x256xf32, #tpu.memory_space<vmem>>, %arg6: memref<1x1x256xf32, #tpu.memory_space<vmem>>) attributes {dimension_semantics = [#tpu.dimension_semantics<parallel>, #tpu.dimension_semantics<parallel>], iteration_bounds = array<i64: 1, 2>, scalar_prefetch = 0 : i64, scratch_operands = 0 : i64, tpu.core_type = #tpu.core_type<tc>, window_params = [{transform_indices = @transform_0, window_bounds = array<i64: 1, 1, 256>}, {transform_indices = @transform_1, window_bounds = array<i64: 1, 256>}, {transform_indices = @transform_2, window_bounds = array<i64: 1, 256>}, {transform_indices = @transform_3, window_bounds = array<i64: 1, 256>}, {transform_indices = @transform_4, window_bounds = array<i64: 1, 1, 256>}]} {
    %c0 = arith.constant 0 : index
    %c0_0 = arith.constant 0 : index
    %c0_1 = arith.constant 0 : index
    %0 = vector.load %arg2[%c0, %c0_0, %c0_1] : memref<1x1x256xf32, #tpu.memory_space<vmem>>, vector<1x1x256xf32>
    %1 = vector.shape_cast %0 : vector<1x1x256xf32> to vector<1x256xf32>
    %c255_i32 = arith.constant 255 : i32
    %2 = tpu.dynamic_rotate %1 by %c255_i32 dim 1 : vector<1x256xf32>, i32 -> vector<1x256xf32>
    %c1_i32 = arith.constant 1 : i32
    %3 = tpu.dynamic_rotate %1 by %c1_i32 dim 1 : vector<1x256xf32>, i32 -> vector<1x256xf32>
    %c0_2 = arith.constant 0 : index
    %c0_3 = arith.constant 0 : index
    %4 = vector.load %arg3[%c0_2, %c0_3] : memref<1x256xf32, #tpu.memory_space<vmem>>, vector<1x256xf32>
    %5 = arith.mulf %1, %4 : vector<1x256xf32>
    %c0_4 = arith.constant 0 : index
    %c0_5 = arith.constant 0 : index
    %6 = vector.load %arg4[%c0_4, %c0_5] : memref<1x256xf32, #tpu.memory_space<vmem>>, vector<1x256xf32>
    %7 = arith.mulf %2, %6 : vector<1x256xf32>
    %8 = arith.addf %5, %7 : vector<1x256xf32>
    %c0_6 = arith.constant 0 : index
    %c0_7 = arith.constant 0 : index
    %9 = vector.load %arg5[%c0_6, %c0_7] : memref<1x256xf32, #tpu.memory_space<vmem>>, vector<1x256xf32>
    %10 = arith.mulf %3, %9 : vector<1x256xf32>
    %11 = arith.addf %8, %10 : vector<1x256xf32>
    %c0_8 = arith.constant 0 : index
    %c0_9 = arith.constant 0 : index
    %c0_10 = arith.constant 0 : index
    %12 = vector.load %arg6[%c0_8, %c0_9, %c0_10] : memref<1x1x256xf32, #tpu.memory_space<vmem>>, vector<1x1x256xf32>
    %13 = vector.shape_cast %12 : vector<1x1x256xf32> to vector<1x256xf32>
    %14 = vector.shape_cast %11 : vector<1x256xf32> to vector<1x1x256xf32>
    tpu.vector_store %arg6[%c0_8, %c0_9, %c0_10], %14 {strides = array<i32>} : memref<1x1x256xf32, #tpu.memory_space<vmem>>, vector<1x1x256xf32>,
    return
  }
  func.func @transform_0(%arg0: i32, %arg1: i32) -> (i32, i32, i32) {
    %c0_i32 = arith.constant 0 : i32
    %c0_i32_0 = arith.constant 0 : i32
    return %arg1, %arg0, %c0_i32 : i32, i32, i32
  }
  func.func @transform_1(%arg0: i32, %arg1: i32) -> (i32, i32) {
    %c0_i32 = arith.constant 0 : i32
    %c0_i32_0 = arith.constant 0 : i32
    return %arg0, %c0_i32 : i32, i32
  }
  func.func @transform_2(%arg0: i32, %arg1: i32) -> (i32, i32) {
    %c0_i32 = arith.constant 0 : i32
    %c0_i32_0 = arith.constant 0 : i32
    return %arg0, %c0_i32 : i32, i32
  }
  func.func @transform_3(%arg0: i32, %arg1: i32) -> (i32, i32) {
    %c0_i32 = arith.constant 0 : i32
    %c0_i32_0 = arith.constant 0 : i32
    return %arg0, %c0_i32 : i32, i32
  }
  func.func @transform_4(%arg0: i32, %arg1: i32) -> (i32, i32, i32) {
    %c0_i32 = arith.constant 0 : i32
    %c0_i32_0 = arith.constant 0 : i32
    return %arg1, %arg0, %c0_i32 : i32, i32, i32
  }
}

</mosaic_0001>

<llo_original>
// kernel: tpu_custom_call.1
$region0: #{tpu_custom_call.1}
  #allocation0 [shape = 'u32[]', space=smem, size = 0x4, offset = 0x4, fixed_abs, tag = 'smem constant byte address 0x4 - core index']
  #allocation1 [shape = 'u32[72,128]{1,0:T(1,128)}', space=vmem, size = 0x9000, scoped, tag = 'internal scratch']
  %s0 = inlined_call_operand.hbm [shape: f32[2,1,256], index: 0, kind: input, shape index: {}]
  %s1 = inlined_call_operand.hbm [shape: f32[1,256], index: 1, kind: input, shape index: {}]
  %s2 = inlined_call_operand.hbm [shape: f32[1,256], index: 2, kind: input, shape index: {}]
  %s3 = inlined_call_operand.vmem [shape: f32[1,256], index: 3, kind: input, shape index: {}]
  %s4 = inlined_call_operand.hbm [shape: f32[2,1,256], index: 4, kind: output, shape index: {}]
  %s5 = sld [smem:[#allocation0]]
  $region61: #{tpu_custom_call.1} parent=0
    _
  %s7 = ssub.s32 1, %s5
  %s8 = scalar_select 0, %s7, %s5
  $region1: #{tpu_custom_call.1} parent=0
    #allocation2 [shape = 'u8[2048]{0}', space=vmem, size = 0x800, scoped, tag = 'input window, operand 0']
    #allocation3 [shape = 's32[2]{0}', space=sflag, size = 0x8, scoped, tag = 'scoped memory for tpu_custom_call.1']
    #allocation4 [shape = 's32[2]{0}', space=sflag, size = 0x8, scoped, tag = 'scoped memory for tpu_custom_call.1']
    #allocation5 [shape = 'u8[1024]{0}', space=vmem, size = 0x400, scoped, tag = 'input window, operand 1, single buffered']
    #allocation6 [shape = 's32[1]{0}', space=sflag, size = 0x4, scoped, tag = 'scoped memory for tpu_custom_call.1']
    #allocation7 [shape = 'u8[1024]{0}', space=vmem, size = 0x400, scoped, tag = 'input window, operand 2, single buffered']
    #allocation8 [shape = 'u8[2048]{0}', space=vmem, size = 0x800, scoped, tag = 'output window, operand 0']
    %9 = vsyncpa [#allocation3], 0
    %s10 = scalar_lea.sflag [#allocation3], 1
    %11 = vsyncpa %s10, 0
    %12 = vsyncpa [#allocation6], 0
    %13 = vsyncpa [#allocation4], 0
    %s14 = scalar_lea.sflag [#allocation4], 1
    %15 = vsyncpa %s14, 0
    loop: start=0, step=1, limit=4
    $region2: #{tpu_custom_call.1} parent=1 // loop_pre_header
      _
    $region3: #{tpu_custom_call.1} parent=1 // loop_header
      %s17 = sphi 0, %s21
      %p18 = scmp.ge.s32.totalorder %s17, 4
      %s24 = sphi 0, %s36
      %s25 = sphi 0, %s32
      %s26 = sphi 0, %s24
      %s27 = sphi 0, %s25
      %s28 = sphi 0, %s26
      %s29 = sphi 0, %s27
      %s41 = sphi 0, %s43
      %s44 = sphi 0, %s41
      %s45 = sphi 0, %s44
      %s61 = sphi 0, %s45
      %s67 = sphi 0, %s69
      %s70 = sphi 0, %s67
      %s71 = sphi 0, %s70
      %s87 = sphi 0, %s71
      %s93 = sphi 0, %s95
      %s96 = sphi 0, %s93
      %s97 = sphi 0, %s96
      %s113 = sphi 0, %s97
      %s119 = sphi 0, %s121
      %s122 = sphi 0, %s119
      %s123 = sphi 0, %s122
      %s139 = sphi 0, %s123
      %s147 = sphi 0, %s149
      %s150 = sphi 0, %s147
      %s151 = sphi 0, %s150
      %s167 = sphi 0, %s151
    $region4: #{tpu_custom_call.1} parent=1 // loop_header_branch
      %20 = sbr.rel (%p18) target = $region8
    $region5: #{tpu_custom_call.1} parent=1 // loop_body
      %s22 = ssub.s32 %s17, 1
      %s23 = ssub.s32 %s17, 2
      %s30 = sadd.s32 1, %s25
      %p31 = scmp.ge.s32.totalorder %s30, 2
      %s32 = scalar_select %p31, 0, %s30
      %s33 = sadd.s32 1, %s24
      %s34 = scalar_select %p31, %s33, %s24
      %p35 = scmp.ge.s32.totalorder %s34, 1
      %s36 = scalar_select %p35, 0, %s34
      %s37 = ssub.s32 %s25, %s32
      %s38 = ssub.s32 %s24, %s36
      %s39 = sor.u32 %s37, %s38
      %p40 = scmp.eq.s32.totalorder %s39, 0
      %s42 = sadd.s32 %s41, 1
      %s43 = scalar_select %p40, %s41, %s42
      %p46 = pneg %p40
      %p47 = scmp.eq.s32.totalorder %s17, 1
      %p48 = por %p46, %p47
      %p49 = scmp.ne.s32.totalorder %s41, %s44
      %p50 = scmp.eq.s32.totalorder %s17, 0
      %p51 = por %p49, %p50
      %p52 = scmp.ne.s32.totalorder %s41, %s44
      %p53 = scmp.eq.s32.totalorder %s22, 1
      %p54 = por %p52, %p53
      %p55 = scmp.ne.s32.totalorder %s44, %s45
      %p56 = scmp.eq.s32.totalorder %s22, 0
      %p57 = por %p55, %p56
      %p58 = scmp.ne.s32.totalorder %s44, %s45
      %p59 = scmp.eq.s32.totalorder %s23, 1
      %p60 = por %p58, %p59
      %p62 = scmp.ne.s32.totalorder %s45, %s61
      %p63 = scmp.eq.s32.totalorder %s23, 0
      %p64 = por %p62, %p63
      %s65 = ssub.s32 %s24, %s36
      %p66 = scmp.eq.s32.totalorder %s65, 0
      %s68 = sadd.s32 %s67, 1
      %s69 = scalar_select %p66, %s67, %s68
      %p72 = pneg %p66
      %p73 = scmp.eq.s32.totalorder %s17, 1
      %p74 = por %p72, %p73
      %p75 = scmp.ne.s32.totalorder %s67, %s70
      %p76 = scmp.eq.s32.totalorder %s17, 0
      %p77 = por %p75, %p76
      %p78 = scmp.ne.s32.totalorder %s67, %s70
      %p79 = scmp.eq.s32.totalorder %s22, 1
      %p80 = por %p78, %p79
      %p81 = scmp.ne.s32.totalorder %s70, %s71
      %p82 = scmp.eq.s32.totalorder %s22, 0
      %p83 = por %p81, %p82
      %p84 = scmp.ne.s32.totalorder %s70, %s71
      %p85 = scmp.eq.s32.totalorder %s23, 1
      %p86 = por %p84, %p85
      %p88 = scmp.ne.s32.totalorder %s71, %s87
      %p89 = scmp.eq.s32.totalorder %s23, 0
      %p90 = por %p88, %p89
      %s91 = ssub.s32 %s24, %s36
      %p92 = scmp.eq.s32.totalorder %s91, 0
      %s94 = sadd.s32 %s93, 1
      %s95 = scalar_select %p92, %s93, %s94
      %p98 = pneg %p92
      %p99 = scmp.eq.s32.totalorder %s17, 1
      %p100 = por %p98, %p99
      %p101 = scmp.ne.s32.totalorder %s93, %s96
      %p102 = scmp.eq.s32.totalorder %s17, 0
      %p103 = por %p101, %p102
      %p104 = scmp.ne.s32.totalorder %s93, %s96
      %p105 = scmp.eq.s32.totalorder %s22, 1
      %p106 = por %p104, %p105
      %p107 = scmp.ne.s32.totalorder %s96, %s97
      %p108 = scmp.eq.s32.totalorder %s22, 0
      %p109 = por %p107, %p108
      %p110 = scmp.ne.s32.totalorder %s96, %s97
      %p111 = scmp.eq.s32.totalorder %s23, 1
      %p112 = por %p110, %p111
      %p114 = scmp.ne.s32.totalorder %s97, %s113
      %p115 = scmp.eq.s32.totalorder %s23, 0
      %p116 = por %p114, %p115
      %s117 = ssub.s32 %s24, %s36
      %p118 = scmp.eq.s32.totalorder %s117, 0
      %s120 = sadd.s32 %s119, 1
      %s121 = scalar_select %p118, %s119, %s120
      %p124 = pneg %p118
      %p125 = scmp.eq.s32.totalorder %s17, 1
      %p126 = por %p124, %p125
      %p127 = scmp.ne.s32.totalorder %s119, %s122
      %p128 = scmp.eq.s32.totalorder %s17, 0
      %p129 = por %p127, %p128
      %p130 = scmp.ne.s32.totalorder %s119, %s122
      %p131 = scmp.eq.s32.totalorder %s22, 1
      %p132 = por %p130, %p131
      %p133 = scmp.ne.s32.totalorder %s122, %s123
      %p134 = scmp.eq.s32.totalorder %s22, 0
      %p135 = por %p133, %p134
      %p136 = scmp.ne.s32.totalorder %s122, %s123
      %p137 = scmp.eq.s32.totalorder %s23, 1
      %p138 = por %p136, %p137
      %p140 = scmp.ne.s32.totalorder %s123, %s139
      %p141 = scmp.eq.s32.totalorder %s23, 0
      %p142 = por %p140, %p141
      %s143 = ssub.s32 %s25, %s32
      %s144 = ssub.s32 %s24, %s36
      %s145 = sor.u32 %s143, %s144
      %p146 = scmp.eq.s32.totalorder %s145, 0
      %s148 = sadd.s32 %s147, 1
      %s149 = scalar_select %p146, %s147, %s148
      %p152 = pneg %p146
      %p153 = scmp.eq.s32.totalorder %s17, 1
      %p154 = por %p152, %p153
      %p155 = scmp.ne.s32.totalorder %s147, %s150
      %p156 = scmp.eq.s32.totalorder %s17, 0
      %p157 = por %p155, %p156
      %p158 = scmp.ne.s32.totalorder %s147, %s150
      %p159 = scmp.eq.s32.totalorder %s22, 1
      %p160 = por %p158, %p159
      %p161 = scmp.ne.s32.totalorder %s150, %s151
      %p162 = scmp.eq.s32.totalorder %s22, 0
      %p163 = por %p161, %p162
      %p164 = scmp.ne.s32.totalorder %s150, %s151
      %p165 = scmp.eq.s32.totalorder %s23, 1
      %p166 = por %p164, %p165
      %p168 = scmp.ne.s32.totalorder %s151, %s167
      %p169 = scmp.eq.s32.totalorder %s23, 0
      %p170 = por %p168, %p169
      %p171 = scmp.le.s32.totalorder 1, %s17
      %p172 = scmp.lt.s32.totalorder %s17, 3
      %p173 = pnand %p171, %p172
      %p174 = pneg %p173
      // Predicated region
      $region9: #{tpu_custom_call.1} parent=5 // pred_check
        _
      $region10: #{tpu_custom_call.1} parent=5 // pred_check_branch
        %176 = sbr.rel (%p173) target = $region12
      $region11: #{tpu_custom_call.1} parent=5 // pred_region
        %s177 = ssub.s32 %s17, 1
        // Predicated region
        $region13: #{tpu_custom_call.1} parent=11 // pred_check
          %p178 = pneg %p83
        $region14: #{tpu_custom_call.1} parent=11 // pred_check_branch
          %180 = sbr.rel (%p178) target = $region16
        $region15: #{tpu_custom_call.1} parent=11 // pred_region
          %182 = vsyncadd [#allocation6], 0
          %s183 = smul.addr %s26, 2
          %s184 = scalar_lea.hbm %s1, %s183
          %s186 = sshll.u32 %s184, 4
          %s187 = int_to_ptr.hbm [resolvable:$true] %s186
          %s188 = sshll.u32 [#allocation5], 4
          %s189 = int_to_ptr.vmem [resolvable:$true] %s188
          %191 = dma.hbm_to_vmem [thread:$0]  %s187, 32, %s189, [#allocation6]
        $region16: #{tpu_custom_call.1} parent=11 // pred_fallthru
          _
        // Predicated region
        $region17: #{tpu_custom_call.1} parent=11 // pred_check
          %p192 = pneg %p109
        $region18: #{tpu_custom_call.1} parent=11 // pred_check_branch
          %194 = sbr.rel (%p192) target = $region20
        $region19: #{tpu_custom_call.1} parent=11 // pred_region
          %196 = vsyncadd [#allocation6], 0
          %s197 = smul.addr %s26, 2
          %s198 = scalar_lea.hbm %s2, %s197
          %s200 = sshll.u32 %s198, 4
          %s201 = int_to_ptr.hbm [resolvable:$true] %s200
          %s202 = sshll.u32 [#allocation7], 4
          %s203 = int_to_ptr.vmem [resolvable:$true] %s202
          %205 = dma.hbm_to_vmem [thread:$0]  %s201, 32, %s203, [#allocation6]
        $region20: #{tpu_custom_call.1} parent=11 // pred_fallthru
          _
        // Predicated region
        $region21: #{tpu_custom_call.1} parent=11 // pred_check
          %p206 = pneg %p135
        $region22: #{tpu_custom_call.1} parent=11 // pred_check_branch
          %208 = sbr.rel (%p206) target = $region24
        $region23: #{tpu_custom_call.1} parent=11 // pred_region
          %p209 = scmp.lt.s32.totalorder %s26, 0
          %s210 = scalar_select %p209, %s26, 0
          %s211 = smul.addr %s210, 2
          %s212 = scalar_lea.vmem %s3, %s211
        $region24: #{tpu_custom_call.1} parent=11 // pred_fallthru
          _
      $region12: #{tpu_custom_call.1} parent=5 // pred_fallthru
        _
      %p213 = scmp.lt.s32.totalorder %s17, 2
      // Predicated region
      $region25: #{tpu_custom_call.1} parent=5 // pred_check
        %p214 = pneg %p213
      $region26: #{tpu_custom_call.1} parent=5 // pred_check_branch
        %216 = sbr.rel (%p214) target = $region28
      $region27: #{tpu_custom_call.1} parent=5 // pred_region
        // Predicated region
        $region29: #{tpu_custom_call.1} parent=27 // pred_check
          %p217 = pneg %p51
        $region30: #{tpu_custom_call.1} parent=27 // pred_check_branch
          %219 = sbr.rel (%p217) target = $region32
        $region31: #{tpu_custom_call.1} parent=27 // pred_region
          %s220 = sand.u32 %s41, 1
          %s221 = scalar_lea.sflag [#allocation3], %s220
          %s222 = sand.u32 %s41, 1
          %s223 = smul.addr %s222, 2
          %s224 = scalar_lea.vmem [#allocation2], %s223
          %226 = vsyncadd %s221, 0
          %s227 = smul.addr %s24, 2
          %s228 = smul.addr %s25, 2
          %s229 = sadd.s32 %s227, %s228
          %s230 = scalar_lea.hbm %s0, %s229
          %s232 = sshll.u32 %s230, 4
          %s233 = int_to_ptr.hbm [resolvable:$true] %s232
          %s234 = sshll.u32 %s224, 4
          %s235 = int_to_ptr.vmem [resolvable:$true] %s234
          %237 = dma.hbm_to_vmem [thread:$0]  %s233, 32, %s235, %s221
        $region32: #{tpu_custom_call.1} parent=27 // pred_fallthru
          _
      $region28: #{tpu_custom_call.1} parent=5 // pred_fallthru
        _
      %p238 = scmp.le.s32.totalorder 1, %s17
      %p239 = scmp.lt.s32.totalorder %s17, 3
      %p240 = pnand %p238, %p239
      %p241 = pneg %p240
      // Predicated region
      $region33: #{tpu_custom_call.1} parent=5 // pred_check
        _
      $region34: #{tpu_custom_call.1} parent=5 // pred_check_branch
        %243 = sbr.rel (%p240) target = $region36
      $region35: #{tpu_custom_call.1} parent=5 // pred_region
        %s244 = ssub.s32 %s17, 1
        %s245 = sand.u32 %s44, 1
        %s246 = scalar_lea.sflag [#allocation3], %s245
        %s247 = sand.u32 %s44, 1
        %s248 = smul.addr %s247, 2
        %s249 = scalar_lea.vmem [#allocation2], %s248
        // Predicated region
        $region37: #{tpu_custom_call.1} parent=35 // pred_check
          %p250 = pneg %p57
        $region38: #{tpu_custom_call.1} parent=35 // pred_check_branch
          %252 = sbr.rel (%p250) target = $region40
        $region39: #{tpu_custom_call.1} parent=35 // pred_region
          %254 = dma.done %s246, 32
        $region40: #{tpu_custom_call.1} parent=35 // pred_fallthru
          _
        // Predicated region
        $region41: #{tpu_custom_call.1} parent=35 // pred_check
          %p255 = pneg %p83
        $region42: #{tpu_custom_call.1} parent=35 // pred_check_branch
          %257 = sbr.rel (%p255) target = $region44
        $region43: #{tpu_custom_call.1} parent=35 // pred_region
          %259 = dma.done [#allocation6], 32
        $region44: #{tpu_custom_call.1} parent=35 // pred_fallthru
          _
        // Predicated region
        $region45: #{tpu_custom_call.1} parent=35 // pred_check
          %p260 = pneg %p109
        $region46: #{tpu_custom_call.1} parent=35 // pred_check_branch
          %262 = sbr.rel (%p260) target = $region48
        $region47: #{tpu_custom_call.1} parent=35 // pred_region
          %264 = dma.done [#allocation6], 32
        $region48: #{tpu_custom_call.1} parent=35 // pred_fallthru
          _
        %s265 = sand.u32 %s44, 1
        %s266 = scalar_lea.sflag [#allocation3], %s265
        %s267 = sand.u32 %s44, 1
        %s268 = smul.addr %s267, 2
        %s269 = scalar_lea.vmem [#allocation2], %s268
        %p270 = pneg %p57
        %p271 = pneg %p54
        %p272 = pneg %p83
        %p273 = pneg %p80
        %p274 = pneg %p109
        %p275 = pneg %p106
        %p276 = scmp.lt.s32.totalorder %s26, 0
        %s277 = scalar_select %p276, %s26, 0
        %s278 = smul.addr %s277, 2
        %s279 = scalar_lea.vmem %s3, %s278
        %p280 = pneg %p135
        %p281 = pneg %p132
        %p282 = pneg %p163
        %p283 = pneg %p160
        %s284 = sand.u32 %s150, 1
        %s285 = scalar_lea.sflag [#allocation4], %s284
        %s286 = sand.u32 %s150, 1
        %s287 = smul.addr %s286, 2
        %s288 = scalar_lea.vmem [#allocation8], %s287
        %p289 = scmp.lt.s32.totalorder %s26, 0
        %s290 = scalar_select %p289, %s26, 0
        %s291 = smul.addr %s290, 2
        %s292 = scalar_lea.vmem %s3, %s291
        %v293 = vld [vmem:[%s249] sm:$0x3]
        %v295 = vperm.slane %v293, 0
        %v296 = vperm.slane %v293, 1
        %299 = vrot.lane.b32.xlu0 %v295, 127
        %v300 = vpop.permute.xlu0 %299
        %301 = vrot.lane.b32.xlu0 %v296, 127
        %v302 = vpop.permute.xlu0 %301
        %v303 = vlaneseq
        %v304 = vand.u32 %v303, 127
        %vm305 = vcmp.lt.s32.totalorder %v304, 127
        %v306 = vsel %vm305, %v300, %v302
        %v307 = vsel %vm305, %v302, %v300
        %308 = vrot.lane.b32.xlu0 %v295, 1
        %v309 = vpop.permute.xlu0 %308
        %310 = vrot.lane.b32.xlu0 %v296, 1
        %v311 = vpop.permute.xlu0 %310
        %vm312 = vcmp.lt.s32.totalorder %v304, 1
        %v313 = vsel %vm312, %v309, %v311
        %v314 = vsel %vm312, %v311, %v309
        %v315 = vld [vmem:[#allocation5] sm:$0x3]
        %v316 = vmul.f32 %v293, %v315
        %v317 = vld [vmem:[#allocation7] sm:$0x3]
        %v319 = vperm.slane %v317, 0
        %v320 = vperm.slane %v317, 1
        %v323 = vmul.f32 %v306, %v319
        %v324 = vmul.f32 %v307, %v320
        %v327 = vrot.slane %v324, 7
        %vm328 = vcmask 1040384
        %v329 = vsel %vm328, %v323, %v327
        %v331 = vadd.f32 %v316, %v329
        %v332 = vld [vmem:[%s292] sm:$0x3]
        %v334 = vperm.slane %v332, 0
        %v335 = vperm.slane %v332, 1
        %v338 = vmul.f32 %v314, %v334
        %v339 = vmul.f32 %v313, %v335
        %v342 = vrot.slane %v339, 7
        %v343 = vsel %vm328, %v338, %v342
        %v345 = vadd.f32 %v331, %v343
        %v346 = vlaneseq
        %vm347 = vcmp.ge.s32.totalorder %v346, 0
        %vm348 = vcmp.lt.s32.totalorder %v346, 256
        %vm349 = vmand %vm347, %vm348
        %350 = vst.msk [vmem:[%s288] sm:$0x3] %vm349, %v345
        %s351 = sand.u32 %s150, 1
        %s352 = scalar_lea.sflag [#allocation4], %s351
        %s353 = sand.u32 %s150, 1
        %s354 = smul.addr %s353, 2
        %s355 = scalar_lea.vmem [#allocation8], %s354
        // Predicated region
        $region49: #{tpu_custom_call.1} parent=35 // pred_check
          %p356 = pneg %p160
        $region50: #{tpu_custom_call.1} parent=35 // pred_check_branch
          %358 = sbr.rel (%p356) target = $region52
        $region51: #{tpu_custom_call.1} parent=35 // pred_region
          %360 = vsyncadd %s352, 0
          %s361 = smul.addr %s26, 2
          %s362 = smul.addr %s27, 2
          %s363 = sadd.s32 %s361, %s362
          %s364 = scalar_lea.hbm %s4, %s363
          %s366 = sshll.u32 %s355, 4
          %s367 = int_to_ptr.vmem [resolvable:$true] %s366
          %s368 = sshll.u32 %s364, 4
          %s369 = int_to_ptr.hbm [resolvable:$true] %s368
          %371 = dma.vmem_to_hbm [thread:$0]  %s367, 32, %s369, %s352
        $region52: #{tpu_custom_call.1} parent=35 // pred_fallthru
          _
      $region36: #{tpu_custom_call.1} parent=5 // pred_fallthru
        _
      %p372 = scmp.le.s32.totalorder 2, %s17
      // Predicated region
      $region53: #{tpu_custom_call.1} parent=5 // pred_check
        %p373 = pneg %p372
      $region54: #{tpu_custom_call.1} parent=5 // pred_check_branch
        %375 = sbr.rel (%p373) target = $region56
      $region55: #{tpu_custom_call.1} parent=5 // pred_region
        %s376 = ssub.s32 %s17, 2
        // Predicated region
        $region57: #{tpu_custom_call.1} parent=55 // pred_check
          %p377 = pneg %p166
        $region58: #{tpu_custom_call.1} parent=55 // pred_check_branch
          %379 = sbr.rel (%p377) target = $region60
        $region59: #{tpu_custom_call.1} parent=55 // pred_region
          %s380 = sand.u32 %s151, 1
          %s381 = scalar_lea.sflag [#allocation4], %s380
          %s382 = sand.u32 %s151, 1
          %s383 = smul.addr %s382, 2
          %s384 = scalar_lea.vmem [#allocation8], %s383
          %386 = dma.done %s381, 32
        $region60: #{tpu_custom_call.1} parent=55 // pred_fallthru
          _
      $region56: #{tpu_custom_call.1} parent=5 // pred_fallthru
        _
    $region6: #{tpu_custom_call.1} parent=1 // loop_footer
      %s21 = sadd.s32 1, %s17
    $region7: #{tpu_custom_call.1} parent=1 // loop_footer_branch
      %16 = sbr.rel target = $region3
    $region8: #{tpu_custom_call.1} parent=1 // loop_exit
      _
    %387 = vsyncpa [#allocation3], 1
    %s388 = scalar_lea.sflag [#allocation3], 1
    %389 = vsyncpa %s388, 1
    %390 = vsyncpa [#allocation6], 1
    %391 = vsyncpa [#allocation4], 1
    %s392 = scalar_lea.sflag [#allocation4], 1
    %393 = vsyncpa %s392, 1

</llo_original>
